<compile_context>
chip_gen: v5e
topology: v5e:2x2
jax: 0.10.0
libtpu: 0.0.40
codegen_flags: <defaults>
</compile_context>

<pallas_src>
import math

import jax
import jax.numpy as jnp
import numpy as np
from jax.experimental import pallas as pl
from jax.experimental.pallas import tpu as pltpu


# ----------------------------------------------------------------------------
# Pass 1: fused projection  x @ W + b  ->  head-major (h, ts, dh) tiles
# ----------------------------------------------------------------------------
def _proj_heads_kernel(x_ref, w_ref, b_ref, o_ref):
    """x: (ts, d_in); w: (d_in, h*dh); b: (1, h*dh); o: (h, ts, dh)."""
    h, _, dh = o_ref.shape
    # One full-width GEMM (N = h*dh): fills the MXU, no per-head matmuls.
    y = jnp.dot(x_ref[...], w_ref[...],
                preferred_element_type=jnp.float32) + b_ref[...]
    # Head split (the PyTorch view+permute), once per sequence tile only.
    for j in range(h):
        o_ref[j, :, :] = y[:, j * dh:(j + 1) * dh].astype(o_ref.dtype)


def _project_to_heads(x, w, bias, h, dh, *, seq_tile, out_dtype):
    b_s, n, d_in = x.shape
    mult = 16 if jnp.dtype(out_dtype).itemsize == 2 else 8
    ts = _pick_tile(n, seq_tile, mult)
    grid = (b_s, n // ts)
    return pl.pallas_call(
        _proj_heads_kernel,
        out_shape=jax.ShapeDtypeStruct((b_s, h, n, dh), out_dtype),
        grid_spec=pltpu.PrefetchScalarGridSpec(
            num_scalar_prefetch=0,
            grid=grid,
            in_specs=[
                pl.BlockSpec((None, ts, d_in), lambda b, si: (b, si, 0)),  # x tile
                pl.BlockSpec((d_in, h * dh), lambda b, si: (0, 0)),        # weight (grid-invariant)
                pl.BlockSpec((1, h * dh), lambda b, si: (0, 0)),           # bias   (grid-invariant)
            ],
            out_specs=pl.BlockSpec((None, h, ts, dh), lambda b, si: (b, 0, si, 0)),
        ),
        compiler_params=pltpu.CompilerParams(
            dimension_semantics=("parallel", "parallel")),
    )(x, w, bias)


# ----------------------------------------------------------------------------
# Pass 2: flash attention + fused output projection
# ----------------------------------------------------------------------------
def _flash_kernel(q_ref, k_ref, v_ref, wo_ref, bo_ref, o_ref,
                  m_ref, l_ref, acc_ref):
    """q: (h, tq, d_k); k: (h, tk, d_k); v: (h, tk, d_v);
       wo: (h*d_v, d_model); bo: (1, d_model); o: (tq, d_model);
       m/l: (h, tq, 1) f32; acc: (h, tq, d_v) f32."""
    ki = pl.program_id(2)
    h = acc_ref.shape[0]

    @pl.when(ki == 0)
    def _():
        m_ref[...] = jnp.full(m_ref.shape, -jnp.inf, dtype=m_ref.dtype)
        l_ref[...] = jnp.zeros(l_ref.shape, dtype=l_ref.dtype)
        acc_ref[...] = jnp.zeros(acc_ref.shape, dtype=acc_ref.dtype)

    # Scores: head-batched MXU contraction. 1/sqrt(d_k) pre-folded into q.
    s = jnp.einsum('hqd,hkd->hqk', q_ref[...], k_ref[...],
                   preferred_element_type=jnp.float32)           # (h, tq, tk)

    # Online (flash) softmax across k-tiles.
    m_prev = m_ref[...]
    m_new = jnp.maximum(m_prev, s.max(axis=-1, keepdims=True))
    alpha = jnp.exp(m_prev - m_new)
    p = jnp.exp(s - m_new)
    l_ref[...] = alpha * l_ref[...] + p.sum(axis=-1, keepdims=True)
    acc_ref[...] = alpha * acc_ref[...] + jnp.einsum(
        'hqk,hkd->hqd', p.astype(v_ref.dtype), v_ref[...],
        preferred_element_type=jnp.float32)
    m_ref[...] = m_new

    @pl.when(ki == pl.num_programs(2) - 1)
    def _():
        inv_l = pl.reciprocal(l_ref[...], approx=True)           # EUP slot
        oh = acc_ref[...] * inv_l                                # (h, tq, d_v) f32
        # Merge heads (lane concat, once per (b, q-tile)) then one full-depth
        # GEMM with K = h*d_v that also performs the head reduction.
        oh_cat = jnp.concatenate([oh[j] for j in range(h)], axis=-1)
        out = jnp.dot(oh_cat.astype(wo_ref.dtype), wo_ref[...],
                      preferred_element_type=jnp.float32) + bo_ref[...]
        o_ref[...] = out.astype(o_ref.dtype)


def _flash_vmem_bytes(h, tq, tk, d_k, d_v, d_model, in_bytes):
    f32 = 4
    est = 0
    est += 2 * h * tq * d_k * in_bytes          # q tile (double-buffered)
    est += 2 * h * tk * d_k * in_bytes          # k tile
    est += 2 * h * tk * d_v * in_bytes          # v tile
    est += 2 * (h * d_v) * d_model * in_bytes   # wo (default double-buffered)
    est += 2 * d_model * in_bytes               # bo
    est += 2 * tq * d_model * in_bytes          # out tile
    est += 2 * h * tq * f32 * 2                 # m, l scratch
    est += h * tq * d_v * f32                   # acc scratch
    est += 2 * h * tq * tk * f32                # score / p temporaries (rough)
    return est


def _flash_attention(qp, kp, vp, wo, bo, *, out_dtype, d_model, q_tile, k_tile):
    b_s, h, nq, d_k = qp.shape
    nk, d_v = vp.shape[2], vp.shape[3]
    mult = 16 if jnp.dtype(qp.dtype).itemsize == 2 else 8
    tq = _pick_tile(nq, q_tile, mult)
    tk = _pick_tile(nk, k_tile, mult)
    grid = (b_s, nq // tq, nk // tk)

    in_bytes = jnp.dtype(qp.dtype).itemsize
    est = _flash_vmem_bytes(h, tq, tk, d_k, d_v, d_model, in_bytes)
    # Computed from actual buffers + headroom, never the full physical VMEM.
    vmem_limit = int(min(max(est + (8 << 20), 32 << 20), 96 << 20))

    return pl.pallas_call(
        _flash_kernel,
        out_shape=jax.ShapeDtypeStruct((b_s, nq, d_model), out_dtype),
        grid_spec=pltpu.PrefetchScalarGridSpec(
            num_scalar_prefetch=0,
            grid=grid,
            in_specs=[
                pl.BlockSpec((None, h, tq, d_k), lambda b, qi, ki: (b, 0, qi, 0)),  # q
                pl.BlockSpec((None, h, tk, d_k), lambda b, qi, ki: (b, 0, ki, 0)),  # k
                pl.BlockSpec((None, h, tk, d_v), lambda b, qi, ki: (b, 0, ki, 0)),  # v
                pl.BlockSpec((h * d_v, d_model), lambda b, qi, ki: (0, 0)),         # wo
                pl.BlockSpec((1, d_model), lambda b, qi, ki: (0, 0)),               # bo
            ],
            out_specs=pl.BlockSpec((None, tq, d_model), lambda b, qi, ki: (b, qi, 0)),
            scratch_shapes=[
                pltpu.VMEM((h, tq, 1), jnp.float32),    # running max m
                pltpu.VMEM((h, tq, 1), jnp.float32),    # running sum l
                pltpu.VMEM((h, tq, d_v), jnp.float32),  # output accumulator
            ],
        ),
        compiler_params=pltpu.CompilerParams(
            # b * (nq/tq) >= 2 shards across v7x's two TensorCores.
            dimension_semantics=("parallel", "parallel", "arbitrary"),
            vmem_limit_bytes=vmem_limit,
        ),
    )(qp, kp, vp, wo, bo)


# ----------------------------------------------------------------------------
# Wrapper (equivalent of ScaledDotProductAttention.forward, eval mode)
# ----------------------------------------------------------------------------
def _pick_tile(n, target, multiple=8):
    """Largest divisor of n that is <= target and a multiple of `multiple`."""
    if n <= target:
        return n
    for t in range(min(target, n), 0, -1):
        if n % t == 0 and t % multiple == 0:
            return t
    return n


def scaled_dot_product_attention(queries, keys, values, params, *, h, d_k, d_v,
                                 q_tile=256, k_tile=256, seq_tile=256,
                                 compute_dtype=None):
    """queries: (b_s, nq, d_model); keys/values: (b_s, nk, d_model).

    params are 2-D (in, out) projection weights and (1, out) biases, exactly as
    produced by init_params (equivalent to the PyTorch nn.Linear parameters).
    compute_dtype: optional (e.g. jnp.bfloat16) dtype for projected Q/K/V fed to
    the MXU; default keeps the input dtype (strict accuracy).
    """
    b_s, nq, d_model = queries.shape
    wq, bq, wk, bk, wv, bv, wo, bo = params
    proj_dtype = compute_dtype if compute_dtype is not None else queries.dtype

    # Fold 1/sqrt(d_k) into the Q projection (zero in-kernel cost).
    scale = 1.0 / math.sqrt(d_k)

    # Pass 1: projections, materialized once (not re-done per q-tile).
    qp = _project_to_heads(queries, wq * scale, bq * scale, h, d_k,
                           seq_tile=seq_tile, out_dtype=proj_dtype)
    kp = _project_to_heads(keys, wk, bk, h, d_k,
                           seq_tile=seq_tile, out_dtype=proj_dtype)
    vp = _project_to_heads(values, wv, bv, h, d_v,
                           seq_tile=seq_tile, out_dtype=proj_dtype)

    # Pass 2: flash attention + fused head-merge output projection.
    return _flash_attention(qp, kp, vp, wo.astype(proj_dtype), bo,
                            out_dtype=queries.dtype, d_model=d_model,
                            q_tile=q_tile, k_tile=k_tile)


# ----------------------------------------------------------------------------
# Parameter init (mirrors PyTorch init_weights) and pure-JAX reference
# ----------------------------------------------------------------------------
def _xavier_uniform(key, out_features, in_features, dtype=jnp.float32):
    bound = math.sqrt(6.0 / (in_features + out_features))
    w = jax.random.uniform(key, (out_features, in_features), dtype=dtype,
                           minval=-bound, maxval=bound)
    return w.T  # store as (in, out) so x @ W matches nn.Linear(x)


def init_params(key, d_model, d_k, d_v, h, dtype=jnp.float32):
    k1, k2, k3, k4 = jax.random.split(key, 4)
    wq = _xavier_uniform(k1, h * d_k, d_model, dtype)
    wk = _xavier_uniform(k2, h * d_k, d_model, dtype)
    wv = _xavier_uniform(k3, h * d_v, d_model, dtype)
    wo = _xavier_uniform(k4, d_model, h * d_v, dtype)
    bq = jnp.zeros((1, h * d_k), dtype)
    bk = jnp.zeros((1, h * d_k), dtype)
    bv = jnp.zeros((1, h * d_v), dtype)
    bo = jnp.zeros((1, d_model), dtype)
    return (wq, bq, wk, bk, wv, bv, wo, bo)


def _reference(queries, keys, values, params, *, h, d_k, d_v):
    """Pure-JAX reference mirroring the PyTorch forward (eval mode)."""
    wq, bq, wk, bk, wv, bv, wo, bo = params
    b_s, nq, _ = queries.shape
    nk = keys.shape[1]
    q = (queries @ wq + bq).reshape(b_s, nq, h, d_k).transpose(0, 2, 1, 3)
    k = (keys @ wk + bk).reshape(b_s, nk, h, d_k).transpose(0, 2, 3, 1)
    v = (values @ wv + bv).reshape(b_s, nk, h, d_v).transpose(0, 2, 1, 3)
    att = jnp.matmul(q, k) / np.sqrt(d_k)
    att = jax.nn.softmax(att, axis=-1)
    out = jnp.matmul(att, v).transpose(0, 2, 1, 3).reshape(b_s, nq, h * d_v)
    return out @ wo + bo


if __name__ == "__main__":
    d_model, d_k, d_v, h = 32, 16, 16, 4
    b_s, nq, nk = 2, 8, 8

    key = jax.random.PRNGKey(0)
    kq, kk, kv, kp = jax.random.split(key, 4)
    queries = jax.random.normal(kq, (b_s, nq, d_model), jnp.float32)
    keys = jax.random.normal(kk, (b_s, nk, d_model), jnp.float32)
    values = jax.random.normal(kv, (b_s, nk, d_model), jnp.float32)
    params = init_params(kp, d_model, d_k, d_v, h)

    out = scaled_dot_product_attention(queries, keys, values, params,
                                       h=h, d_k=d_k, d_v=d_v)
    out = jax.block_until_ready(out)

    ref = _reference(queries, keys, values, params, h=h, d_k=d_k, d_v=d_v)
    assert out.shape == (b_s, nq, d_model)
    # Tolerance accounts for approx reciprocal (EUP) + online-softmax reassociation.
    np.testing.assert_allclose(np.asarray(out), np.asarray(ref), rtol=5e-3, atol=5e-3)

    print("KERNEL_OK")
</pallas_src>

<mosaic_0001>
module attributes {stable_mosaic.version = 11 : i64} {
  func.func @_proj_heads_kernel(%arg0: i32, %arg1: i32, %arg2: memref<1x8x32xf32, #tpu.memory_space<vmem>>, %arg3: memref<32x64xf32, #tpu.memory_space<vmem>>, %arg4: memref<1x64xf32, #tpu.memory_space<vmem>>, %arg5: memref<1x4x8x16xf32, #tpu.memory_space<vmem>>) attributes {dimension_semantics = [#tpu.dimension_semantics<parallel>, #tpu.dimension_semantics<parallel>], iteration_bounds = array<i64: 2, 1>, scalar_prefetch = 0 : i64, scratch_operands = 0 : i64, tpu.core_type = #tpu.core_type<tc>, window_params = [{transform_indices = @transform_0, window_bounds = array<i64: 1, 8, 32>}, {pipeline_mode = #tpu.pipeline_mode<synchronous>, transform_indices = @transform_1, window_bounds = array<i64: 32, 64>}, {pipeline_mode = #tpu.pipeline_mode<synchronous>, transform_indices = @transform_2, window_bounds = array<i64: 1, 64>}, {transform_indices = @transform_3, window_bounds = array<i64: 1, 4, 8, 16>}]} {
    %c0 = arith.constant 0 : index
    %c0_0 = arith.constant 0 : index
    %c0_1 = arith.constant 0 : index
    %0 = vector.load %arg2[%c0, %c0_0, %c0_1] : memref<1x8x32xf32, #tpu.memory_space<vmem>>, vector<1x8x32xf32>
    %1 = vector.shape_cast %0 : vector<1x8x32xf32> to vector<8x32xf32>
    %c0_2 = arith.constant 0 : index
    %c0_3 = arith.constant 0 : index
    %2 = vector.load %arg3[%c0_2, %c0_3] : memref<32x64xf32, #tpu.memory_space<vmem>>, vector<32x64xf32>
    %cst = arith.constant dense<0.000000e+00> : vector<8x64xf32>
    %3 = tpu.matmul %1, %2, %cst {dimension_numbers = #tpu.dot_dimension_numbers<[1], [0], [0], [1], [0, 0, 1, 1], [], []>} : vector<8x32xf32>, vector<32x64xf32>, vector<8x64xf32> -> vector<8x64xf32>
    %c0_4 = arith.constant 0 : index
    %c0_5 = arith.constant 0 : index
    %4 = vector.load %arg4[%c0_4, %c0_5] : memref<1x64xf32, #tpu.memory_space<vmem>>, vector<1x64xf32>
    %5 = vector.broadcast %4 : vector<1x64xf32> to vector<8x64xf32>
    %6 = arith.addf %3, %5 : vector<8x64xf32>
    %7 = vector.extract_strided_slice %6 {offsets = [0, 0], sizes = [8, 16], strides = [1, 1]} : vector<8x64xf32> to vector<8x16xf32>
    %c0_6 = arith.constant 0 : index
    %c0_7 = arith.constant 0 : index
    %c0_8 = arith.constant 0 : index
    %c0_9 = arith.constant 0 : index
    %8 = vector.load %arg5[%c0_6, %c0_7, %c0_8, %c0_9] : memref<1x4x8x16xf32, #tpu.memory_space<vmem>>, vector<1x1x8x16xf32>
    %9 = vector.shape_cast %8 : vector<1x1x8x16xf32> to vector<8x16xf32>
    %10 = vector.shape_cast %7 : vector<8x16xf32> to vector<1x1x8x16xf32>
    tpu.vector_store %arg5[%c0_6, %c0_7, %c0_8, %c0_9], %10 {strides = array<i32>} : memref<1x4x8x16xf32, #tpu.memory_space<vmem>>, vector<1x1x8x16xf32>,
    %11 = vector.extract_strided_slice %6 {offsets = [0, 16], sizes = [8, 16], strides = [1, 1]} : vector<8x64xf32> to vector<8x16xf32>
    %c0_10 = arith.constant 0 : index
    %c1 = arith.constant 1 : index
    %c0_11 = arith.constant 0 : index
    %c0_12 = arith.constant 0 : index
    %12 = vector.load %arg5[%c0_10, %c1, %c0_11, %c0_12] : memref<1x4x8x16xf32, #tpu.memory_space<vmem>>, vector<1x1x8x16xf32>
    %13 = vector.shape_cast %12 : vector<1x1x8x16xf32> to vector<8x16xf32>
    %14 = vector.shape_cast %11 : vector<8x16xf32> to vector<1x1x8x16xf32>
    tpu.vector_store %arg5[%c0_10, %c1, %c0_11, %c0_12], %14 {strides = array<i32>} : memref<1x4x8x16xf32, #tpu.memory_space<vmem>>, vector<1x1x8x16xf32>,
    %15 = vector.extract_strided_slice %6 {offsets = [0, 32], sizes = [8, 16], strides = [1, 1]} : vector<8x64xf32> to vector<8x16xf32>
    %c0_13 = arith.constant 0 : index
    %c2 = arith.constant 2 : index
    %c0_14 = arith.constant 0 : index
    %c0_15 = arith.constant 0 : index
    %16 = vector.load %arg5[%c0_13, %c2, %c0_14, %c0_15] : memref<1x4x8x16xf32, #tpu.memory_space<vmem>>, vector<1x1x8x16xf32>
    %17 = vector.shape_cast %16 : vector<1x1x8x16xf32> to vector<8x16xf32>
    %18 = vector.shape_cast %15 : vector<8x16xf32> to vector<1x1x8x16xf32>
    tpu.vector_store %arg5[%c0_13, %c2, %c0_14, %c0_15], %18 {strides = array<i32>} : memref<1x4x8x16xf32, #tpu.memory_space<vmem>>, vector<1x1x8x16xf32>,
    %19 = vector.extract_strided_slice %6 {offsets = [0, 48], sizes = [8, 16], strides = [1, 1]} : vector<8x64xf32> to vector<8x16xf32>
    %c0_16 = arith.constant 0 : index
    %c3 = arith.constant 3 : index
    %c0_17 = arith.constant 0 : index
    %c0_18 = arith.constant 0 : index
    %20 = vector.load %arg5[%c0_16, %c3, %c0_17, %c0_18] : memref<1x4x8x16xf32, #tpu.memory_space<vmem>>, vector<1x1x8x16xf32>
    %21 = vector.shape_cast %20 : vector<1x1x8x16xf32> to vector<8x16xf32>
    %22 = vector.shape_cast %19 : vector<8x16xf32> to vector<1x1x8x16xf32>
    tpu.vector_store %arg5[%c0_16, %c3, %c0_17, %c0_18], %22 {strides = array<i32>} : memref<1x4x8x16xf32, #tpu.memory_space<vmem>>, vector<1x1x8x16xf32>,
    return
  }
  func.func @transform_0(%arg0: i32, %arg1: i32) -> (i32, i32, i32) {
    %c0_i32 = arith.constant 0 : i32
    %c0_i32_0 = arith.constant 0 : i32
    return %arg0, %arg1, %c0_i32 : i32, i32, i32
  }
  func.func @transform_1(%arg0: i32, %arg1: i32) -> (i32, i32) {
    %c0_i32 = arith.constant 0 : i32
    %c0_i32_0 = arith.constant 0 : i32
    %c0_i32_1 = arith.constant 0 : i32
    return %c0_i32, %c0_i32_0 : i32, i32
  }
  func.func @transform_2(%arg0: i32, %arg1: i32) -> (i32, i32) {
    %c0_i32 = arith.constant 0 : i32
    %c0_i32_0 = arith.constant 0 : i32
    %c0_i32_1 = arith.constant 0 : i32
    return %c0_i32, %c0_i32_0 : i32, i32
  }
  func.func @transform_3(%arg0: i32, %arg1: i32) -> (i32, i32, i32, i32) {
    %c0_i32 = arith.constant 0 : i32
    %c0_i32_0 = arith.constant 0 : i32
    %c0_i32_1 = arith.constant 0 : i32
    return %arg0, %c0_i32, %arg1, %c0_i32_0 : i32, i32, i32, i32
  }
}

</mosaic_0001>

<llo_original>
// kernel: tpu_custom_call.1
$region0: #{tpu_custom_call.1}
  #allocation0 [shape = 'u32[]', space=smem, size = 0x4, offset = 0x4, fixed_abs, tag = 'smem constant byte address 0x4 - core index']
  #allocation1 [shape = 'u32[72,128]{1,0:T(1,128)}', space=vmem, size = 0x9000, scoped, tag = 'internal scratch']
  %s0 = inlined_call_operand.hbm [shape: f32[2,8,32], index: 0, kind: input, shape index: {}]
  %s1 = inlined_call_operand.hbm [shape: f32[32,64], index: 1, kind: input, shape index: {}]
  %s2 = inlined_call_operand.vmem [shape: f32[1,64], index: 2, kind: input, shape index: {}]
  %s3 = inlined_call_operand.hbm [shape: f32[2,4,8,16], index: 3, kind: output, shape index: {}]
  %s4 = sld [smem:[#allocation0]]
  $region53: #{tpu_custom_call.1} parent=0
    _
  %s6 = ssub.s32 1, %s4
  %s7 = scalar_select 0, %s6, %s4
  $region1: #{tpu_custom_call.1} parent=0
    #allocation2 [shape = 'u8[8192]{0}', space=vmem, size = 0x2000, scoped, tag = 'input window, operand 0']
    #allocation3 [shape = 's32[2]{0}', space=sflag, size = 0x8, scoped, tag = 'scoped memory for tpu_custom_call.1']
    #allocation4 [shape = 's32[2]{0}', space=sflag, size = 0x8, scoped, tag = 'scoped memory for tpu_custom_call.1']
    #allocation5 [shape = 'u8[16384]{0}', space=vmem, size = 0x4000, scoped, tag = 'input window, operand 1, single buffered']
    #allocation6 [shape = 's32[1]{0}', space=sflag, size = 0x4, scoped, tag = 'scoped memory for tpu_custom_call.1']
    #allocation7 [shape = 'u8[32768]{0}', space=vmem, size = 0x8000, scoped, tag = 'output window, operand 0']
    %8 = vsyncpa [#allocation3], 0
    %s9 = scalar_lea.sflag [#allocation3], 1
    %10 = vsyncpa %s9, 0
    %11 = vsyncpa [#allocation6], 0
    %12 = vsyncpa [#allocation4], 0
    %s13 = scalar_lea.sflag [#allocation4], 1
    %14 = vsyncpa %s13, 0
    loop: start=0, step=1, limit=4
    $region2: #{tpu_custom_call.1} parent=1 // loop_pre_header
      _
    $region3: #{tpu_custom_call.1} parent=1 // loop_header
      %s16 = sphi 0, %s20
      %p17 = scmp.ge.s32.totalorder %s16, 4
      %s23 = sphi 0, %s35
      %s24 = sphi 0, %s31
      %s25 = sphi 0, %s23
      %s26 = sphi 0, %s24
      %s27 = sphi 0, %s25
      %s28 = sphi 0, %s26
      %s40 = sphi 0, %s42
      %s43 = sphi 0, %s40
      %s44 = sphi 0, %s43
      %s60 = sphi 0, %s44
      %s64 = sphi 0, %s64
      %s66 = sphi 0, %s64
      %s67 = sphi 0, %s66
      %s81 = sphi 0, %s67
      %s85 = sphi 0, %s85
      %s87 = sphi 0, %s85
      %s88 = sphi 0, %s87
      %s102 = sphi 0, %s88
      %s110 = sphi 0, %s112
      %s113 = sphi 0, %s110
      %s114 = sphi 0, %s113
      %s130 = sphi 0, %s114
    $region4: #{tpu_custom_call.1} parent=1 // loop_header_branch
      %19 = sbr.rel (%p17) target = $region8
    $region5: #{tpu_custom_call.1} parent=1 // loop_body
      %s21 = ssub.s32 %s16, 1
      %s22 = ssub.s32 %s16, 2
      %s29 = sadd.s32 1, %s24
      %p30 = scmp.ge.s32.totalorder %s29, 1
      %s31 = scalar_select %p30, 0, %s29
      %s32 = sadd.s32 1, %s23
      %s33 = scalar_select %p30, %s32, %s23
      %p34 = scmp.ge.s32.totalorder %s33, 2
      %s35 = scalar_select %p34, 0, %s33
      %s36 = ssub.s32 %s23, %s35
      %s37 = ssub.s32 %s24, %s31
      %s38 = sor.u32 %s36, %s37
      %p39 = scmp.eq.s32.totalorder %s38, 0
      %s41 = sadd.s32 %s40, 1
      %s42 = scalar_select %p39, %s40, %s41
      %p45 = pneg %p39
      %p46 = scmp.eq.s32.totalorder %s16, 1
      %p47 = por %p45, %p46
      %p48 = scmp.ne.s32.totalorder %s40, %s43
      %p49 = scmp.eq.s32.totalorder %s16, 0
      %p50 = por %p48, %p49
      %p51 = scmp.ne.s32.totalorder %s40, %s43
      %p52 = scmp.eq.s32.totalorder %s21, 1
      %p53 = por %p51, %p52
      %p54 = scmp.ne.s32.totalorder %s43, %s44
      %p55 = scmp.eq.s32.totalorder %s21, 0
      %p56 = por %p54, %p55
      %p57 = scmp.ne.s32.totalorder %s43, %s44
      %p58 = scmp.eq.s32.totalorder %s22, 1
      %p59 = por %p57, %p58
      %p61 = scmp.ne.s32.totalorder %s44, %s60
      %p62 = scmp.eq.s32.totalorder %s22, 0
      %p63 = por %p61, %p62
      %s65 = sadd.s32 %s64, 1
      %p68 = scmp.eq.s32.totalorder %s16, 1
      %p69 = scmp.ne.s32.totalorder %s64, %s66
      %p70 = scmp.eq.s32.totalorder %s16, 0
      %p71 = por %p69, %p70
      %p72 = scmp.ne.s32.totalorder %s64, %s66
      %p73 = scmp.eq.s32.totalorder %s21, 1
      %p74 = por %p72, %p73
      %p75 = scmp.ne.s32.totalorder %s66, %s67
      %p76 = scmp.eq.s32.totalorder %s21, 0
      %p77 = por %p75, %p76
      %p78 = scmp.ne.s32.totalorder %s66, %s67
      %p79 = scmp.eq.s32.totalorder %s22, 1
      %p80 = por %p78, %p79
      %p82 = scmp.ne.s32.totalorder %s67, %s81
      %p83 = scmp.eq.s32.totalorder %s22, 0
      %p84 = por %p82, %p83
      %s86 = sadd.s32 %s85, 1
      %p89 = scmp.eq.s32.totalorder %s16, 1
      %p90 = scmp.ne.s32.totalorder %s85, %s87
      %p91 = scmp.eq.s32.totalorder %s16, 0
      %p92 = por %p90, %p91
      %p93 = scmp.ne.s32.totalorder %s85, %s87
      %p94 = scmp.eq.s32.totalorder %s21, 1
      %p95 = por %p93, %p94
      %p96 = scmp.ne.s32.totalorder %s87, %s88
      %p97 = scmp.eq.s32.totalorder %s21, 0
      %p98 = por %p96, %p97
      %p99 = scmp.ne.s32.totalorder %s87, %s88
      %p100 = scmp.eq.s32.totalorder %s22, 1
      %p101 = por %p99, %p100
      %p103 = scmp.ne.s32.totalorder %s88, %s102
      %p104 = scmp.eq.s32.totalorder %s22, 0
      %p105 = por %p103, %p104
      %s106 = ssub.s32 %s23, %s35
      %s107 = ssub.s32 %s24, %s31
      %s108 = sor.u32 %s106, %s107
      %p109 = scmp.eq.s32.totalorder %s108, 0
      %s111 = sadd.s32 %s110, 1
      %s112 = scalar_select %p109, %s110, %s111
      %p115 = pneg %p109
      %p116 = scmp.eq.s32.totalorder %s16, 1
      %p117 = por %p115, %p116
      %p118 = scmp.ne.s32.totalorder %s110, %s113
      %p119 = scmp.eq.s32.totalorder %s16, 0
      %p120 = por %p118, %p119
      %p121 = scmp.ne.s32.totalorder %s110, %s113
      %p122 = scmp.eq.s32.totalorder %s21, 1
      %p123 = por %p121, %p122
      %p124 = scmp.ne.s32.totalorder %s113, %s114
      %p125 = scmp.eq.s32.totalorder %s21, 0
      %p126 = por %p124, %p125
      %p127 = scmp.ne.s32.totalorder %s113, %s114
      %p128 = scmp.eq.s32.totalorder %s22, 1
      %p129 = por %p127, %p128
      %p131 = scmp.ne.s32.totalorder %s114, %s130
      %p132 = scmp.eq.s32.totalorder %s22, 0
      %p133 = por %p131, %p132
      %p134 = scmp.le.s32.totalorder 1, %s16
      %p135 = scmp.lt.s32.totalorder %s16, 3
      %p136 = pnand %p134, %p135
      %p137 = pneg %p136
      // Predicated region
      $region9: #{tpu_custom_call.1} parent=5 // pred_check
        _
      $region10: #{tpu_custom_call.1} parent=5 // pred_check_branch
        %139 = sbr.rel (%p136) target = $region12
      $region11: #{tpu_custom_call.1} parent=5 // pred_region
        %s140 = ssub.s32 %s16, 1
        // Predicated region
        $region13: #{tpu_custom_call.1} parent=11 // pred_check
          %p141 = pneg %p77
        $region14: #{tpu_custom_call.1} parent=11 // pred_check_branch
          %143 = sbr.rel (%p141) target = $region16
        $region15: #{tpu_custom_call.1} parent=11 // pred_region
          %145 = vsyncadd [#allocation6], 0
          %s146 = sshll.u32 %s1, 4
          %s147 = int_to_ptr.hbm [resolvable:$true] %s146
          %s148 = sshll.u32 [#allocation5], 4
          %s149 = int_to_ptr.vmem [resolvable:$true] %s148
          %154 = dma.hbm_to_vmem [thread:$0]  %s147, 512, %s149, [#allocation6], 128, 128, 8
        $region16: #{tpu_custom_call.1} parent=11 // pred_fallthru
          _
        // Predicated region
        $region17: #{tpu_custom_call.1} parent=11 // pred_check
          %p155 = pneg %p98
        $region18: #{tpu_custom_call.1} parent=11 // pred_check_branch
          %157 = sbr.rel (%p155) target = $region20
        $region19: #{tpu_custom_call.1} parent=11 // pred_region
          _
        $region20: #{tpu_custom_call.1} parent=11 // pred_fallthru
          _
      $region12: #{tpu_custom_call.1} parent=5 // pred_fallthru
        _
      %p158 = scmp.lt.s32.totalorder %s16, 2
      // Predicated region
      $region21: #{tpu_custom_call.1} parent=5 // pred_check
        %p159 = pneg %p158
      $region22: #{tpu_custom_call.1} parent=5 // pred_check_branch
        %161 = sbr.rel (%p159) target = $region24
      $region23: #{tpu_custom_call.1} parent=5 // pred_region
        // Predicated region
        $region25: #{tpu_custom_call.1} parent=23 // pred_check
          %p162 = pneg %p50
        $region26: #{tpu_custom_call.1} parent=23 // pred_check_branch
          %164 = sbr.rel (%p162) target = $region28
        $region27: #{tpu_custom_call.1} parent=23 // pred_region
          %s165 = sand.u32 %s40, 1
          %s166 = scalar_lea.sflag [#allocation3], %s165
          %s167 = sand.u32 %s40, 1
          %s168 = smul.addr %s167, 8
          %s169 = scalar_lea.vmem [#allocation2], %s168
          %171 = vsyncadd %s166, 0
          %s172 = sadd.s32 %s24, %s23
          %s173 = smul.addr %s172, 8
          %s174 = scalar_lea.hbm %s0, %s173
          %s176 = sshll.u32 %s174, 4
          %s177 = int_to_ptr.hbm [resolvable:$true] %s176
          %s178 = sshll.u32 %s169, 4
          %s179 = int_to_ptr.vmem [resolvable:$true] %s178
          %181 = dma.hbm_to_vmem [thread:$0]  %s177, 128, %s179, %s166
        $region28: #{tpu_custom_call.1} parent=23 // pred_fallthru
          _
      $region24: #{tpu_custom_call.1} parent=5 // pred_fallthru
        _
      %p182 = scmp.le.s32.totalorder 1, %s16
      %p183 = scmp.lt.s32.totalorder %s16, 3
      %p184 = pnand %p182, %p183
      %p185 = pneg %p184
      // Predicated region
      $region29: #{tpu_custom_call.1} parent=5 // pred_check
        _
      $region30: #{tpu_custom_call.1} parent=5 // pred_check_branch
        %187 = sbr.rel (%p184) target = $region32
      $region31: #{tpu_custom_call.1} parent=5 // pred_region
        %s188 = ssub.s32 %s16, 1
        %s189 = sand.u32 %s43, 1
        %s190 = scalar_lea.sflag [#allocation3], %s189
        %s191 = sand.u32 %s43, 1
        %s192 = smul.addr %s191, 8
        %s193 = scalar_lea.vmem [#allocation2], %s192
        // Predicated region
        $region33: #{tpu_custom_call.1} parent=31 // pred_check
          %p194 = pneg %p56
        $region34: #{tpu_custom_call.1} parent=31 // pred_check_branch
          %196 = sbr.rel (%p194) target = $region36
        $region35: #{tpu_custom_call.1} parent=31 // pred_region
          %198 = dma.done %s190, 128
        $region36: #{tpu_custom_call.1} parent=31 // pred_fallthru
          _
        // Predicated region
        $region37: #{tpu_custom_call.1} parent=31 // pred_check
          %p199 = pneg %p77
        $region38: #{tpu_custom_call.1} parent=31 // pred_check_branch
          %201 = sbr.rel (%p199) target = $region40
        $region39: #{tpu_custom_call.1} parent=31 // pred_region
          %203 = dma.done [#allocation6], 512
        $region40: #{tpu_custom_call.1} parent=31 // pred_fallthru
          _
        %s204 = sand.u32 %s43, 1
        %s205 = scalar_lea.sflag [#allocation3], %s204
        %s206 = sand.u32 %s43, 1
        %s207 = smul.addr %s206, 8
        %s208 = scalar_lea.vmem [#allocation2], %s207
        %p209 = pneg %p56
        %p210 = pneg %p53
        %p211 = pneg %p77
        %p212 = pneg %p74
        %p213 = pneg %p98
        %p214 = pneg %p95
        %p215 = pneg %p126
        %p216 = pneg %p123
        %s217 = sand.u32 %s113, 1
        %s218 = scalar_lea.sflag [#allocation4], %s217
        %s219 = sand.u32 %s113, 1
        %s220 = smul.addr %s219, 32
        %s221 = scalar_lea.vmem [#allocation7], %s220
        %v222 = vld [vmem:[%s193] sm:$0xff]
        %v223 = vld [vmem:[#allocation5] sm:$0xff]
        %v224 = vld [vmem:[#allocation5 + $0x8] sm:$0xff]
        %v225 = vld [vmem:[#allocation5 + $0x10] sm:$0xff]
        %v226 = vld [vmem:[#allocation5 + $0x18] sm:$0xff]
        %v227 = vld [vmem:[%s2] sm:$0x1]
        %v229 = vperm.slane %v227, 0
        %vm231 = vcmask 261120
        %v233 = vsel %vm231, %v222, 0
        %235 = vmatpush.msra.mxu0 0.0
        %236 = vmatpush.msra.mxu0 0.0
        %237 = vmatpush.msra.mxu0 0.0
        %238 = vmatpush.msra.mxu0 0.0
        %239 = vmatpush.msra.mxu0 0.0
        %240 = vmatpush.msra.mxu0 0.0
        %241 = vmatpush.msra.mxu0 0.0
        %242 = vmatpush.msra.mxu0 0.0
        %243 = vmatpush.msra.mxu0 0.0
        %244 = vmatpush.msra.mxu0 0.0
        %245 = vmatpush.msra.mxu0 0.0
        %246 = vmatpush.msra.mxu0 0.0
        %247 = vmatpush.msra.mxu0 %v226
        %248 = vmatpush.msra.mxu0 %v225
        %249 = vmatpush.msra.mxu0 %v224
        %250 = vmatpush.msra.mxu0 %v223
        %251 = vmatmul.f32.gmra.mxu0 %v233
        %v252 = vpop.f32.mrf.mxu0
        %v253 = vadd.f32 %v229, %v252
        %254 = vdwg.mxu0
        %vm255 = vcmask 130048
        %256 = vst.msk [vmem:[%s221] sm:$0xff] %vm255, %v253
        %258 = vrot.lane.b32.xlu0 %v253, 112
        %v259 = vpop.permute.xlu0 %258
        %s261 = scalar_lea.vmem %s221, 8 [#allocation7]
        %262 = vst.msk [vmem:[%s261] sm:$0xff] %vm255, %v259
        %263 = vrot.lane.b32.xlu0 %v253, 96
        %v264 = vpop.permute.xlu0 %263
        %s266 = scalar_lea.vmem %s221, 16 [#allocation7]
        %267 = vst.msk [vmem:[%s266] sm:$0xff] %vm255, %v264
        %268 = vrot.lane.b32.xlu0 %v253, 80
        %v269 = vpop.permute.xlu0 %268
        %s271 = scalar_lea.vmem %s221, 24 [#allocation7]
        %272 = vst.msk [vmem:[%s271] sm:$0xff] %vm255, %v269
        %s273 = sand.u32 %s113, 1
        %s274 = scalar_lea.sflag [#allocation4], %s273
        %s275 = sand.u32 %s113, 1
        %s276 = smul.addr %s275, 32
        %s277 = scalar_lea.vmem [#allocation7], %s276
        // Predicated region
        $region41: #{tpu_custom_call.1} parent=31 // pred_check
          %p278 = pneg %p123
        $region42: #{tpu_custom_call.1} parent=31 // pred_check_branch
          %280 = sbr.rel (%p278) target = $region44
        $region43: #{tpu_custom_call.1} parent=31 // pred_region
          %282 = vsyncadd %s274, 0
          %s283 = smul.addr %s25, 4
          %s284 = sadd.s32 %s26, %s283
          %s285 = smul.addr %s284, 8
          %s286 = scalar_lea.hbm %s3, %s285
          %s287 = sshll.u32 %s277, 4
          %s288 = int_to_ptr.vmem [resolvable:$true] %s287
          %s289 = sshll.u32 %s286, 4
          %s290 = int_to_ptr.hbm [resolvable:$true] %s289
          %295 = dma.vmem_to_hbm [thread:$0]  %s288, 512, %s290, %s274, 128, 128, 8
        $region44: #{tpu_custom_call.1} parent=31 // pred_fallthru
          _
      $region32: #{tpu_custom_call.1} parent=5 // pred_fallthru
        _
      %p296 = scmp.le.s32.totalorder 2, %s16
      // Predicated region
      $region45: #{tpu_custom_call.1} parent=5 // pred_check
        %p297 = pneg %p296
      $region46: #{tpu_custom_call.1} parent=5 // pred_check_branch
        %299 = sbr.rel (%p297) target = $region48
      $region47: #{tpu_custom_call.1} parent=5 // pred_region
        %s300 = ssub.s32 %s16, 2
        // Predicated region
        $region49: #{tpu_custom_call.1} parent=47 // pred_check
          %p301 = pneg %p129
        $region50: #{tpu_custom_call.1} parent=47 // pred_check_branch
          %303 = sbr.rel (%p301) target = $region52
        $region51: #{tpu_custom_call.1} parent=47 // pred_region
          %s304 = sand.u32 %s114, 1
          %s305 = scalar_lea.sflag [#allocation4], %s304
          %s306 = sand.u32 %s114, 1
          %s307 = smul.addr %s306, 32
          %s308 = scalar_lea.vmem [#allocation7], %s307
          %310 = dma.done %s305, 512
        $region52: #{tpu_custom_call.1} parent=47 // pred_fallthru
          _
      $region48: #{tpu_custom_call.1} parent=5 // pred_fallthru
        _
    $region6: #{tpu_custom_call.1} parent=1 // loop_footer
      %s20 = sadd.s32 1, %s16
    $region7: #{tpu_custom_call.1} parent=1 // loop_footer_branch
      %15 = sbr.rel target = $region3
    $region8: #{tpu_custom_call.1} parent=1 // loop_exit
      _
    %311 = vsyncpa [#allocation3], 1
    %s312 = scalar_lea.sflag [#allocation3], 1
    %313 = vsyncpa %s312, 1
    %314 = vsyncpa [#allocation6], 1
    %315 = vsyncpa [#allocation4], 1
    %s316 = scalar_lea.sflag [#allocation4], 1
    %317 = vsyncpa %s316, 1

</llo_original>
